<compile_context>
chip_gen: v7x
topology: tpu7x:2x2x1
jax: 0.10.0
libtpu: 0.0.40
codegen_flags: <defaults>
</compile_context>

<pallas_src>
import functools
import math

import jax
import jax.numpy as jnp
from jax import lax
from jax.experimental import pallas as pl
from jax.experimental.pallas import tpu as pltpu


VMEM_LIMIT_BYTES = 64 * 1024 * 1024  # safe on v5e/v6e (128 MiB) and v7x (64 MiB physical)


# ----------------------------- tiling helpers --------------------------------

def _round_up(x, m):
    return ((x + m - 1) // m) * m


def _tile(dim, target, align):
    """Largest `align`-aligned divisor of `dim` that is <= target (full extent if none)."""
    if dim <= target:
        return dim
    t = (target // align) * align
    while t >= align:
        if dim % t == 0:
            return t
        t -= align
    return dim  # fall back to the full extent (only hit for un-padded odd dims)


# ----------------------------- linear kernels --------------------------------

def _matmul_kernel(x_ref, w_ref, o_ref, acc_ref):
    @pl.when(pl.program_id(2) == 0)
    def _():
        acc_ref[...] = jnp.zeros_like(acc_ref)

    acc_ref[...] += jnp.dot(x_ref[...], w_ref[...], preferred_element_type=jnp.float32)

    @pl.when(pl.program_id(2) == pl.num_programs(2) - 1)
    def _():
        o_ref[...] = acc_ref[...].astype(o_ref.dtype)


def _matmul_bias_kernel(x_ref, w_ref, b_ref, o_ref, acc_ref):
    @pl.when(pl.program_id(2) == 0)
    def _():
        acc_ref[...] = jnp.zeros_like(acc_ref)

    acc_ref[...] += jnp.dot(x_ref[...], w_ref[...], preferred_element_type=jnp.float32)

    @pl.when(pl.program_id(2) == pl.num_programs(2) - 1)
    def _():
        o_ref[...] = (acc_ref[...] + b_ref[...].astype(jnp.float32)).astype(o_ref.dtype)


def pallas_linear(x, w, b=None, *, tm_target=512, tn_target=256, tk_target=512,
                  out_dtype=None):
    """x: (M, K), w: (K, N), b: optional (N,) f32. Returns (M, N). Tiled, pipelined matmul."""
    M, K = x.shape
    Kw, N = w.shape
    assert K == Kw
    out_dtype = x.dtype if out_dtype is None else out_dtype

    # Pad the token axis so the sublane tile is bf16-aligned (16) and never falls back
    # to the full extent at large M.
    sub_align = 16
    M_pad = _round_up(M, sub_align)
    if M_pad != M:
        x = jnp.pad(x, ((0, M_pad - M), (0, 0)))

    tm = _tile(M_pad, tm_target, sub_align)
    tn = _tile(N, tn_target, 128)
    tk = _tile(K, tk_target, 128)
    grid = (M_pad // tm, N // tn, K // tk)

    x_spec = pl.BlockSpec((tm, tk), lambda i, j, k: (i, k))
    w_spec = pl.BlockSpec((tk, tn), lambda i, j, k: (k, j))
    o_spec = pl.BlockSpec((tm, tn), lambda i, j, k: (i, j))
    out_shape = jax.ShapeDtypeStruct((M_pad, N), out_dtype)
    scratch = [pltpu.VMEM((tm, tn), jnp.float32)]
    params = pltpu.CompilerParams(
        dimension_semantics=("parallel", "parallel", "arbitrary"),
        vmem_limit_bytes=VMEM_LIMIT_BYTES)

    if b is None:
        out = pl.pallas_call(
            _matmul_kernel,
            out_shape=out_shape,
            grid=grid,
            in_specs=[x_spec, w_spec],
            out_specs=o_spec,
            scratch_shapes=scratch,
            compiler_params=params,
        )(x, w)
    else:
        b2 = b.reshape(1, N)
        b_spec = pl.BlockSpec((1, tn), lambda i, j, k: (0, j))
        out = pl.pallas_call(
            _matmul_bias_kernel,
            out_shape=out_shape,
            grid=grid,
            in_specs=[x_spec, w_spec, b_spec],
            out_specs=o_spec,
            scratch_shapes=scratch,
            compiler_params=params,
        )(x, w, b2)

    return out[:M] if M_pad != M else out


# -------------------------- flash attention kernel ---------------------------

def _flash_attention_kernel(q_ref, kv_ref, o_ref, m_ref, l_ref, acc_ref, *,
                            heads, dim_head, n_k_valid, tk, padded_k):
    # q_ref  : (1, tq, heads*dim_head)   bf16, softmax scale already folded into to_q_w
    # kv_ref : (1, tk, 2*heads*dim_head) bf16, [ K heads | V heads ] fused projection
    # o_ref  : (1, tq, heads*dim_head)   lane-dense output slab
    # m_ref/l_ref : (heads, tq, 1) f32 running max / denom
    # acc_ref     : (tq, heads*dim_head) f32 accumulator
    ki = pl.program_id(2)
    inner = heads * dim_head

    @pl.when(ki == 0)
    def _():
        m_ref[...] = jnp.full_like(m_ref, -jnp.inf)
        l_ref[...] = jnp.zeros_like(l_ref)
        acc_ref[...] = jnp.zeros_like(acc_ref)

    if padded_k:
        # Padded keys (zeros appended in the wrapper) are masked out of the softmax.
        col = ki * tk + lax.broadcasted_iota(jnp.int32, (1, tk), 1)   # (1, tk)
        key_mask = col < n_k_valid

    # TODO(synk): for very large head counts the static unroll below could be replaced by a
    # fori_loop at the cost of giving up the single lane-dense accumulator update.
    alpha_parts = []
    pv_parts = []
    for h in range(heads):  # static unroll; slices below are compile-time offsets
        sl = pl.ds(h * dim_head, dim_head)
        q = q_ref[0, :, sl]                                       # (tq, d) bf16
        k = kv_ref[0, :, sl]                                      # (tk, d) bf16
        v = kv_ref[0, :, pl.ds(inner + h * dim_head, dim_head)]   # (tk, d) bf16

        # scores: contract the last dims directly (no transpose of k materialized), f32 acc
        s = lax.dot_general(q, k, (((1,), (1,)), ((), ())),
                            preferred_element_type=jnp.float32)   # (tq, tk) f32
        if padded_k:
            s = jnp.where(key_mask, s, -jnp.inf)

        m_prev = m_ref[h]                                         # (tq, 1)
        m_new = jnp.maximum(m_prev, jnp.max(s, axis=-1, keepdims=True))
        alpha = jnp.exp(m_prev - m_new)                           # (tq, 1) f32
        p = jnp.exp(s - m_new)                                    # (tq, tk) f32
        l_ref[h] = alpha * l_ref[h] + jnp.sum(p, axis=-1, keepdims=True)
        m_ref[h] = m_new

        pv = jnp.dot(p.astype(v.dtype), v,
                     preferred_element_type=jnp.float32)          # (tq, d) f32
        alpha_parts.append(jnp.broadcast_to(alpha, pv.shape))
        pv_parts.append(pv)

    # One lane-dense read-modify-write of the (tq, heads*dim_head) accumulator per kv step.
    alpha_full = jnp.concatenate(alpha_parts, axis=-1)
    pv_full = jnp.concatenate(pv_parts, axis=-1)
    acc_ref[...] = alpha_full * acc_ref[...] + pv_full

    @pl.when(ki == pl.num_programs(2) - 1)
    def _():
        # Exact reciprocal here: runs once per q tile, cost is negligible.
        inv_parts = [jnp.broadcast_to(pl.reciprocal(l_ref[h], approx=False),
                                      (acc_ref.shape[0], dim_head))
                     for h in range(heads)]
        inv_full = jnp.concatenate(inv_parts, axis=-1)            # (tq, inner)
        o_ref[0] = (acc_ref[...] * inv_full).astype(o_ref.dtype)


def pallas_flash_attention(q, kv, *, heads, dim_head, tq_target=128, tk_target=256):
    """q: (B, Nq, heads*dim_head); kv: (B, Nk, 2*heads*dim_head). Returns (B, Nq, h*d)."""
    B, Nq, inner = q.shape
    _, Nk, two_inner = kv.shape
    assert inner == heads * dim_head and two_inner == 2 * inner

    # bf16 sublane alignment; pad instead of falling back to full-extent tiles.
    sub_align = 16
    Nq_pad = _round_up(Nq, sub_align)
    Nk_pad = _round_up(Nk, sub_align)
    if Nq_pad != Nq:
        q = jnp.pad(q, ((0, 0), (0, Nq_pad - Nq), (0, 0)))
    if Nk_pad != Nk:
        kv = jnp.pad(kv, ((0, 0), (0, Nk_pad - Nk), (0, 0)))

    tq = _tile(Nq_pad, tq_target, sub_align)
    tk = _tile(Nk_pad, tk_target, sub_align)   # consider 512 on v6e/v7x after profiling
    grid = (B, Nq_pad // tq, Nk_pad // tk)

    kernel = functools.partial(_flash_attention_kernel,
                               heads=heads, dim_head=dim_head,
                               n_k_valid=Nk, tk=tk, padded_k=(Nk_pad != Nk))
    out = pl.pallas_call(
        kernel,
        out_shape=jax.ShapeDtypeStruct((B, Nq_pad, inner), q.dtype),
        grid=grid,
        in_specs=[
            pl.BlockSpec((1, tq, inner), lambda b, qi, ki: (b, qi, 0)),
            pl.BlockSpec((1, tk, two_inner), lambda b, qi, ki: (b, ki, 0)),
        ],
        out_specs=pl.BlockSpec((1, tq, inner), lambda b, qi, ki: (b, qi, 0)),
        scratch_shapes=[
            pltpu.VMEM((heads, tq, 1), jnp.float32),   # running max per head
            pltpu.VMEM((heads, tq, 1), jnp.float32),   # running softmax denom per head
            pltpu.VMEM((tq, inner), jnp.float32),      # f32 output accumulator
        ],
        compiler_params=pltpu.CompilerParams(
            dimension_semantics=("parallel", "parallel", "arbitrary"),
            vmem_limit_bytes=VMEM_LIMIT_BYTES),
    )(q, kv)
    return out[:, :Nq] if Nq_pad != Nq else out


# -------------------- module: params + forward -------------------------------

def init_params(key, query_dim, context_dim, heads, dim_head, dtype=jnp.float32):
    """Raw parameters, same layout/init as the PyTorch module (weights transposed)."""
    inner_dim = heads * dim_head
    k1, k2, k3, k4, k5 = jax.random.split(key, 5)

    def lin_w(k, fan_in, fan_out):
        bound = 1.0 / math.sqrt(fan_in)
        return jax.random.uniform(k, (fan_in, fan_out), dtype, -bound, bound)

    return {
        "to_q_w": lin_w(k1, query_dim, inner_dim),
        "to_k_w": lin_w(k2, context_dim, inner_dim),
        "to_v_w": lin_w(k3, context_dim, inner_dim),
        "to_out_w": lin_w(k4, inner_dim, query_dim),
        "to_out_b": jax.random.uniform(
            k5, (query_dim,), dtype,
            -1.0 / math.sqrt(inner_dim), 1.0 / math.sqrt(inner_dim)),
    }


def prepare_params(params, *, dim_head, compute_dtype=jnp.bfloat16):
    """One-time parameter prep: fold softmax scale into to_q_w, fuse K/V weights, cast bf16."""
    scale = 1.0 / math.sqrt(dim_head)
    return {
        "to_q_w": (params["to_q_w"] * scale).astype(compute_dtype),
        "w_kv": jnp.concatenate([params["to_k_w"], params["to_v_w"]],
                                axis=1).astype(compute_dtype),
        "to_out_w": params["to_out_w"].astype(compute_dtype),
        "to_out_b": params["to_out_b"].astype(jnp.float32),   # bias added in f32
    }


def memory_efficient_cross_attention(prep, x, context=None, *, heads, dim_head,
                                     compute_dtype=jnp.bfloat16):
    """Forward pass of MemoryEfficientCrossAttention (eval mode, dropout=0, no mask)."""
    if context is None:
        context = x
    out_dtype = x.dtype
    b, n_q, _ = x.shape
    _, n_k, _ = context.shape
    inner_dim = heads * dim_head

    # Projections in bf16 (f32 accumulation inside the kernels). K & V are fused into one
    # matmul so the context activation is read from HBM once and the MXU RHS is twice as wide.
    xc = x.reshape(b * n_q, -1).astype(compute_dtype)
    cc = context.reshape(b * n_k, -1).astype(compute_dtype)
    q = pallas_linear(xc, prep["to_q_w"]).reshape(b, n_q, inner_dim)
    kv = pallas_linear(cc, prep["w_kv"]).reshape(b, n_k, 2 * inner_dim)

    # Flash attention; heads are split/merged inside the kernel via static slices of the
    # VMEM tiles, so no XLA reshape/transpose between the pallas_calls.
    out = pallas_flash_attention(q, kv, heads=heads, dim_head=dim_head)

    # to_out: Linear(inner_dim, query_dim) with bias; Dropout(p=0) is identity in eval.
    out = pallas_linear(out.reshape(b * n_q, inner_dim),
                        prep["to_out_w"], prep["to_out_b"], out_dtype=out_dtype)
    return out.reshape(b, n_q, -1)


# ----------------------------- main ------------------------------------------

if __name__ == "__main__":
    # Small shapes consistent with the module's "b n c" forward.
    B = 2
    N_Q = 16          # query tokens
    N_K = 8           # context tokens
    QUERY_DIM = 32
    CONTEXT_DIM = 32
    HEADS = 2
    DIM_HEAD = 16

    key = jax.random.PRNGKey(0)
    kx, kc, kp = jax.random.split(key, 3)

    x = jax.random.normal(kx, (B, N_Q, QUERY_DIM), jnp.float32)
    context = jax.random.normal(kc, (B, N_K, CONTEXT_DIM), jnp.float32)
    params = init_params(kp, QUERY_DIM, CONTEXT_DIM, HEADS, DIM_HEAD)
    prep = prepare_params(params, dim_head=DIM_HEAD)

    out = memory_efficient_cross_attention(
        prep, x, context, heads=HEADS, dim_head=DIM_HEAD)
    out = jax.block_until_ready(out)

    # Pure-JAX f32 reference check.
    def ref_forward(params, x, context):
        q = x @ params["to_q_w"]
        k = context @ params["to_k_w"]
        v = context @ params["to_v_w"]
        b = x.shape[0]

        def split(t):
            n = t.shape[1]
            return t.reshape(b, n, HEADS, DIM_HEAD).transpose(0, 2, 1, 3)

        q, k, v = split(q), split(k), split(v)
        s = jnp.einsum("bhqd,bhkd->bhqk", q, k) / math.sqrt(DIM_HEAD)
        p = jax.nn.softmax(s, axis=-1)
        o = jnp.einsum("bhqk,bhkd->bhqd", p, v)
        o = o.transpose(0, 2, 1, 3).reshape(b, -1, HEADS * DIM_HEAD)
        return o @ params["to_out_w"] + params["to_out_b"]

    ref = ref_forward(params, x, context)
    assert out.shape == (B, N_Q, QUERY_DIM), out.shape
    # Tolerance accounts for bf16 activations/weights on the MXU (f32 accumulation kept).
    assert jnp.allclose(out, ref, atol=5e-2, rtol=5e-2), (
        "mismatch vs reference, max abs err = %f"
        % float(jnp.max(jnp.abs(out - ref))))

    # TODO(synk): the module's `mask` argument raises NotImplementedError upstream, so it is
    # intentionally not supported here either.
    print("KERNEL_OK")
</pallas_src>

<mosaic_0001>
module attributes {stable_mosaic.version = 11 : i64} {
  func.func @_matmul_kernel(%arg0: i32, %arg1: i32, %arg2: i32, %arg3: memref<32x32xbf16, #tpu.memory_space<vmem>>, %arg4: memref<32x32xbf16, #tpu.memory_space<vmem>>, %arg5: memref<32x32xbf16, #tpu.memory_space<vmem>>, %arg6: memref<32x32xf32, #tpu.memory_space<vmem>>) attributes {dimension_semantics = [#tpu.dimension_semantics<parallel>, #tpu.dimension_semantics<parallel>, #tpu.dimension_semantics<arbitrary>], iteration_bounds = array<i64: 1, 1, 1>, scalar_prefetch = 0 : i64, scratch_operands = 1 : i64, tpu.core_type = #tpu.core_type<tc>, window_params = [{transform_indices = @transform_0, window_bounds = array<i64: 32, 32>}, {transform_indices = @transform_1, window_bounds = array<i64: 32, 32>}, {transform_indices = @transform_2, window_bounds = array<i64: 32, 32>}]} {
    %c0_i32 = arith.constant 0 : i32
    %0 = arith.cmpi eq, %arg2, %c0_i32 : i32
    %1 = arith.extui %0 : i1 to i32
    %c0_i32_0 = arith.constant 0 : i32
    %2 = arith.cmpi ne, %1, %c0_i32_0 : i32
    scf.if %2 {
      %cst_10 = arith.constant 0.000000e+00 : f32
      %12 = vector.broadcast %cst_10 : f32 to vector<32x32xf32>
      %c0_11 = arith.constant 0 : index
      %c0_12 = arith.constant 0 : index
      %13 = vector.load %arg6[%c0_11, %c0_12] : memref<32x32xf32, #tpu.memory_space<vmem>>, vector<32x32xf32>
      tpu.vector_store %arg6[%c0_11, %c0_12], %12 {strides = array<i32>} : memref<32x32xf32, #tpu.memory_space<vmem>>, vector<32x32xf32>,
    } else {
    }
    %c0 = arith.constant 0 : index
    %c0_1 = arith.constant 0 : index
    %3 = vector.load %arg6[%c0, %c0_1] : memref<32x32xf32, #tpu.memory_space<vmem>>, vector<32x32xf32>
    %c0_2 = arith.constant 0 : index
    %c0_3 = arith.constant 0 : index
    %4 = vector.load %arg3[%c0_2, %c0_3] : memref<32x32xbf16, #tpu.memory_space<vmem>>, vector<32x32xbf16>
    %c0_4 = arith.constant 0 : index
    %c0_5 = arith.constant 0 : index
    %5 = vector.load %arg4[%c0_4, %c0_5] : memref<32x32xbf16, #tpu.memory_space<vmem>>, vector<32x32xbf16>
    %cst = arith.constant dense<0.000000e+00> : vector<32x32xf32>
    %6 = tpu.matmul %4, %5, %cst {dimension_numbers = #tpu.dot_dimension_numbers<[1], [0], [0], [1], [0, 0, 1, 1], [], []>} : vector<32x32xbf16>, vector<32x32xbf16>, vector<32x32xf32> -> vector<32x32xf32>
    %7 = arith.addf %3, %6 : vector<32x32xf32>
    %c0_6 = arith.constant 0 : index
    %c0_7 = arith.constant 0 : index
    %8 = vector.load %arg6[%c0_6, %c0_7] : memref<32x32xf32, #tpu.memory_space<vmem>>, vector<32x32xf32>
    tpu.vector_store %arg6[%c0_6, %c0_7], %7 {strides = array<i32>} : memref<32x32xf32, #tpu.memory_space<vmem>>, vector<32x32xf32>,
    %c0_i32_8 = arith.constant 0 : i32
    %9 = arith.cmpi eq, %arg2, %c0_i32_8 : i32
    %10 = arith.extui %9 : i1 to i32
    %c0_i32_9 = arith.constant 0 : i32
    %11 = arith.cmpi ne, %10, %c0_i32_9 : i32
    scf.if %11 {
      %c0_10 = arith.constant 0 : index
      %c0_11 = arith.constant 0 : index
      %12 = vector.load %arg6[%c0_10, %c0_11] : memref<32x32xf32, #tpu.memory_space<vmem>>, vector<32x32xf32>
      %13 = arith.truncf %12 : vector<32x32xf32> to vector<32x32xbf16>
      %c0_12 = arith.constant 0 : index
      %c0_13 = arith.constant 0 : index
      %14 = vector.load %arg5[%c0_12, %c0_13] : memref<32x32xbf16, #tpu.memory_space<vmem>>, vector<32x32xbf16>
      tpu.vector_store %arg5[%c0_12, %c0_13], %13 {strides = array<i32>} : memref<32x32xbf16, #tpu.memory_space<vmem>>, vector<32x32xbf16>,
    } else {
    }
    return
  }
  func.func @transform_0(%arg0: i32, %arg1: i32, %arg2: i32) -> (i32, i32) {
    %c0_i32 = arith.constant 0 : i32
    return %arg0, %arg2 : i32, i32
  }
  func.func @transform_1(%arg0: i32, %arg1: i32, %arg2: i32) -> (i32, i32) {
    %c0_i32 = arith.constant 0 : i32
    return %arg2, %arg1 : i32, i32
  }
  func.func @transform_2(%arg0: i32, %arg1: i32, %arg2: i32) -> (i32, i32) {
    %c0_i32 = arith.constant 0 : i32
    return %arg0, %arg1 : i32, i32
  }
}

</mosaic_0001>

<llo_original>
// kernel: tpu_custom_call.1
$region0: #{tpu_custom_call.1}
  #allocation0 [shape = 'u32[]', space=smem, size = 0x4, offset = 0x4, fixed_abs, tag = 'smem constant byte address 0x4 - core index']
  #allocation1 [shape = 'u32[144,128]{1,0:T(1,128)}', space=vmem, size = 0x12000, scoped, tag = 'internal scratch']
  #allocation2 [shape = 'f32[32,32]{1,0:T(8,128)}', space=vmem, size = 0x4000, scoped, tag = 'scratch operand']
  %s0 = inlined_call_operand.hbm [shape: bf16[32,32], index: 0, kind: input, shape index: {}]
  %s1 = inlined_call_operand.hbm [shape: bf16[32,32], index: 1, kind: input, shape index: {}]
  %s2 = inlined_call_operand.hbm [shape: bf16[32,32], index: 2, kind: output, shape index: {}]
  %s3 = sld [smem:[#allocation0]]
  $region34: #{tpu_custom_call.1} parent=0
    _
  %s5 = ssub.s32 1, %s3
  %s6 = scalar_select 0, %s5, %s3
  $region1: #{tpu_custom_call.1} parent=0
    #allocation3 [shape = 'u8[8192]{0}', space=vmem, size = 0x2000, scoped, tag = 'input window, operand 0, single buffered']
    #allocation4 [shape = 's32[1]{0}', space=sflag, size = 0x4, scoped, tag = 'scoped memory for tpu_custom_call.1']
    #allocation5 [shape = 's32[1]{0}', space=sflag, size = 0x4, scoped, tag = 'scoped memory for tpu_custom_call.1']
    #allocation6 [shape = 'u8[8192]{0}', space=vmem, size = 0x2000, scoped, tag = 'input window, operand 1, single buffered']
    #allocation7 [shape = 's32[1]{0}', space=sflag, size = 0x4, scoped, tag = 'scoped memory for tpu_custom_call.1']
    #allocation8 [shape = 'u8[8192]{0}', space=vmem, size = 0x2000, scoped, tag = 'output window, operand 0, single buffered']
    %7 = vsyncpa [#allocation4], 0
    %8 = vsyncpa [#allocation7], 0
    %9 = vsyncpa [#allocation5], 0
    // Predicated region
    $region2: #{tpu_custom_call.1} parent=1 // pred_check
      _
    $region3: #{tpu_custom_call.1} parent=1 // pred_check_branch
      %11 = sbr.rel (0) target = $region5
    $region4: #{tpu_custom_call.1} parent=1 // pred_region
      %s13 = ssub.s32 256, 256
      %14 = vsyncadd [#allocation4], %s13
      %s15 = sshll.u32 [#allocation3], 4
      %s16 = int_to_ptr.vmem [resolvable:$true] %s15
      %21 = dma.hbm_to_vmem [thread:$0]  %s0, 256, %s16, [#allocation4], 64, 64, 4
    $region5: #{tpu_custom_call.1} parent=1 // pred_fallthru
      _
    // Predicated region
    $region6: #{tpu_custom_call.1} parent=1 // pred_check
      _
    $region7: #{tpu_custom_call.1} parent=1 // pred_check_branch
      %23 = sbr.rel (0) target = $region9
    $region8: #{tpu_custom_call.1} parent=1 // pred_region
      %s25 = ssub.s32 256, 256
      %26 = vsyncadd [#allocation7], %s25
      %s27 = sshll.u32 [#allocation6], 4
      %s28 = int_to_ptr.vmem [resolvable:$true] %s27
      %33 = dma.hbm_to_vmem [thread:$0]  %s1, 256, %s28, [#allocation7], 64, 64, 4
    $region9: #{tpu_custom_call.1} parent=1 // pred_fallthru
      _
    // Predicated region
    $region10: #{tpu_custom_call.1} parent=1 // pred_check
      _
    $region11: #{tpu_custom_call.1} parent=1 // pred_check_branch
      %35 = sbr.rel (0) target = $region13
    $region12: #{tpu_custom_call.1} parent=1 // pred_region
      %36 = dma.done [#allocation4], 256
    $region13: #{tpu_custom_call.1} parent=1 // pred_fallthru
      _
    // Predicated region
    $region14: #{tpu_custom_call.1} parent=1 // pred_check
      _
    $region15: #{tpu_custom_call.1} parent=1 // pred_check_branch
      %38 = sbr.rel (0) target = $region17
    $region16: #{tpu_custom_call.1} parent=1 // pred_region
      %39 = dma.done [#allocation7], 256
    $region17: #{tpu_custom_call.1} parent=1 // pred_fallthru
      _
    %p41 = scmp.eq.s32.totalorder 0, 0
    // Predicated region
    $region18: #{tpu_custom_call.1} parent=1 // pred_check
      %p42 = pneg %p41
    $region19: #{tpu_custom_call.1} parent=1 // pred_check_branch
      %44 = sbr.rel (%p42) target = $region21
    $region20: #{tpu_custom_call.1} parent=1 // pred_region
      %vm45 = vcmask 261120
      %46 = vst.msk [vmem:[#allocation2] sm:$0xff] %vm45, 0.0
      %47 = vst.msk [vmem:[#allocation2 + $0x8] sm:$0xff] %vm45, 0.0
      %48 = vst.msk [vmem:[#allocation2 + $0x10] sm:$0xff] %vm45, 0.0
      %49 = vst.msk [vmem:[#allocation2 + $0x18] sm:$0xff] %vm45, 0.0
    $region21: #{tpu_custom_call.1} parent=1 // pred_fallthru
      _
    %v50 = vld [vmem:[#allocation2] sm:$0xff]
    %v51 = vld [vmem:[#allocation2 + $0x8] sm:$0xff]
    %v52 = vld [vmem:[#allocation2 + $0x10] sm:$0xff]
    %v53 = vld [vmem:[#allocation2 + $0x18] sm:$0xff]
    %v54 = vld [vmem:[#allocation3] sm:$0xf]
    %v55 = vld [vmem:[#allocation3 + $0x4] sm:$0xf]
    %v56 = vld [vmem:[#allocation3 + $0x8] sm:$0xf]
    %v57 = vld [vmem:[#allocation3 + $0xc] sm:$0xf]
    %v58 = vld [vmem:[#allocation6] sm:$0xf]
    %v59 = vld [vmem:[#allocation6 + $0x4] sm:$0xf]
    %v60 = vld [vmem:[#allocation6 + $0x8] sm:$0xf]
    %v61 = vld [vmem:[#allocation6 + $0xc] sm:$0xf]
    %v66 = vunpack.c.l.b16 %v54
    %v67 = vunpack.c.l.b16 %v55
    %v68 = vunpack.c.l.b16 %v56
    %v69 = vunpack.c.l.b16 %v57
    %v70 = vpack.c.b16 %v67, %v66
    %v71 = vpack.c.b16 %v69, %v68
    %v76 = vunpack.c.l.b16 %v58
    %v77 = vunpack.c.l.b16 %v59
    %v78 = vunpack.c.l.b16 %v60
    %v79 = vunpack.c.l.b16 %v61
    %v80 = vpack.c.b16 %v77, %v76
    %v81 = vpack.c.b16 %v79, %v78
    %vm84 = vcmask 261120
    %v86 = vsel %vm84, %v70, 0
    %v89 = vsel %vm84, %v71, 0
    %91 = vmatprep.subr.bf16.mxu0 0
    %92 = vmatpush1.bf16.msra.mxu0 %v80
    %93 = vmatprep.subr.bf16.mxu0 0
    %94 = vmatpush1.bf16.msra.mxu0 %v81
    %95 = vmatprep.subr.bf16.mxu0 0
    %96 = vmatpush1.bf16.msra.mxu0 0
    %97 = vmatprep.subr.bf16.mxu0 0
    %98 = vmatpush1.bf16.msra.mxu0 0
    %99 = vmatprep.subr.bf16.mxu0 0
    %100 = vmatpush1.bf16.msra.mxu0 0
    %101 = vmatprep.subr.bf16.mxu0 0
    %102 = vmatpush1.bf16.msra.mxu0 0
    %103 = vmatprep.subr.bf16.mxu0 0
    %104 = vmatpush1.bf16.msra.mxu0 0
    %105 = vmatprep.subr.bf16.mxu0 0
    %106 = vmatpush1.bf16.msra.mxu0 0
    %107 = vmatprep.subr.bf16.mxu0 0
    %108 = vmatpush1.bf16.msra.mxu0 0
    %109 = vmatprep.subr.bf16.mxu0 0
    %110 = vmatpush1.bf16.msra.mxu0 0
    %111 = vmatprep.subr.bf16.mxu0 0
    %112 = vmatpush1.bf16.msra.mxu0 0
    %113 = vmatprep.subr.bf16.mxu0 0
    %114 = vmatpush1.bf16.msra.mxu0 0
    %115 = vmatprep.subr.bf16.mxu0 0
    %116 = vmatpush1.bf16.msra.mxu0 0
    %117 = vmatprep.subr.bf16.mxu0 0
    %118 = vmatpush1.bf16.msra.mxu0 0
    %119 = vmatprep.subr.bf16.mxu0 0
    %120 = vmatpush1.bf16.msra.mxu0 0
    %121 = vmatprep.subr.bf16.mxu0 0
    %122 = vmatpush1.bf16.msra.mxu0 0
    %123 = vmatprep.mubr.bf16.mxu0 0
    %124 = vmatmul.mubr.bf16.gmra.mrb[0].mxu0 %v86
    %v125 = vpop.f32.mrb[0].mxu0
    %v126 = vadd.f32 0.0, %v125
    %v127 = vpop.f32.mrb[0].mxu0
    %v128 = vpop.f32.mrb[0].mxu0
    %v129 = vadd.f32 0.0, %v128
    %v130 = vpop.f32.mrb[0].mxu0
    %131 = vmatprep.mubr.bf16.mxu0 0
    %132 = vmatmul.mubr.bf16.gmra.mrb[0].mxu0 %v89
    %v133 = vpop.f32.mrb[0].mxu0
    %v134 = vadd.f32 0.0, %v133
    %v135 = vpop.f32.mrb[0].mxu0
    %v136 = vpop.f32.mrb[0].mxu0
    %v137 = vadd.f32 0.0, %v136
    %v138 = vpop.f32.mrb[0].mxu0
    %139 = vdwg.mxu0
    %v140 = vadd.f32 %v50, %v126
    %v141 = vadd.f32 %v51, %v129
    %v142 = vadd.f32 %v52, %v134
    %v143 = vadd.f32 %v53, %v137
    %144 = vst.msk [vmem:[#allocation2] sm:$0xff] %vm84, %v140
    %145 = vst.msk [vmem:[#allocation2 + $0x8] sm:$0xff] %vm84, %v141
    %146 = vst.msk [vmem:[#allocation2 + $0x10] sm:$0xff] %vm84, %v142
    %147 = vst.msk [vmem:[#allocation2 + $0x18] sm:$0xff] %vm84, %v143
    // Predicated region
    $region22: #{tpu_custom_call.1} parent=1 // pred_check
      %p148 = pneg %p41
    $region23: #{tpu_custom_call.1} parent=1 // pred_check_branch
      %150 = sbr.rel (%p148) target = $region25
    $region24: #{tpu_custom_call.1} parent=1 // pred_region
      %v151 = vld [vmem:[#allocation2] sm:$0xff]
      %v152 = vld [vmem:[#allocation2 + $0x8] sm:$0xff]
      %v153 = vld [vmem:[#allocation2 + $0x10] sm:$0xff]
      %v154 = vld [vmem:[#allocation2 + $0x18] sm:$0xff]
      %v155 = vpack.c.bf16 %v152, %v151
      %v156 = vpack.c.bf16 %v154, %v153
      %v159 = vunpack.c.l.b16 %v155
      %v160 = vunpack.c.h.b16 %v155
      %v161 = vunpack.c.l.b16 %v156
      %v162 = vunpack.c.h.b16 %v156
      %v163 = vpack.c.b16 %v159, %v159
      %v164 = vpack.c.b16 %v160, %v160
      %v165 = vpack.c.b16 %v161, %v161
      %v166 = vpack.c.b16 %v162, %v162
      %vm171 = vcmask 257024
      %172 = vst.msk [vmem:[#allocation8] sm:$0xf] %vm171, %v163
      %173 = vst.msk [vmem:[#allocation8 + $0x4] sm:$0xf] %vm171, %v164
      %174 = vst.msk [vmem:[#allocation8 + $0x8] sm:$0xf] %vm171, %v165
      %175 = vst.msk [vmem:[#allocation8 + $0xc] sm:$0xf] %vm171, %v166
    $region25: #{tpu_custom_call.1} parent=1 // pred_fallthru
      _
    // Predicated region
    $region26: #{tpu_custom_call.1} parent=1 // pred_check
      _
    $region27: #{tpu_custom_call.1} parent=1 // pred_check_branch
      %177 = sbr.rel (0) target = $region29
    $region28: #{tpu_custom_call.1} parent=1 // pred_region
      %s179 = ssub.s32 256, 256
      %180 = vsyncadd [#allocation5], %s179
      %s181 = sshll.u32 [#allocation8], 4
      %s182 = int_to_ptr.vmem [resolvable:$true] %s181
      %187 = dma.vmem_to_hbm [thread:$0]  %s182, 256, %s2, [#allocation5], 64, 64, 4
    $region29: #{tpu_custom_call.1} parent=1 // pred_fallthru
      _
    // Predicated region
    $region30: #{tpu_custom_call.1} parent=1 // pred_check
      _
    $region31: #{tpu_custom_call.1} parent=1 // pred_check_branch
      %189 = sbr.rel (0) target = $region33
    $region32: #{tpu_custom_call.1} parent=1 // pred_region
      %190 = dma.done [#allocation5], 256
    $region33: #{tpu_custom_call.1} parent=1 // pred_fallthru
      _
    %191 = vsyncpa [#allocation4], 1
    %192 = vsyncpa [#allocation7], 1
    %193 = vsyncpa [#allocation5], 1

</llo_original>
